<compile_context>
chip_gen: v6e
topology: v6e:2x2x1
jax: 0.10.0
libtpu: 0.0.40
codegen_flags: <defaults>
</compile_context>

<pallas_src>
import numpy as np
import jax
import jax.numpy as jnp
from jax import lax
from jax.experimental import pallas as pl
from jax.experimental.pallas import tpu as pltpu


def _leaky(v, slope=0.2):
    return jnp.where(v > 0, v, slope * v)


def _make_block_kernel(H, W):
    """Kernel factory (H, W are static spatial dims)."""
    HW = H * W
    # tap order k = (dy+1)*3 + (dx+1)  ==  ky*3 + kx  (matches weight reshape & masks)
    offsets = tuple(dy * W + dx for dy in (-1, 0, 1) for dx in (-1, 0, 1))

    def conv3x3(inp, m_ref, w_ref, b_ref):
        # inp:   (C, HW)      f32   channels on sublanes, HW on lanes
        # m_ref: (9, 1, HW)   f32   0/1 zero-padding masks per tap
        # w_ref: (Cout, 9*C)  bf16  fused 3x3 taps
        # b_ref: (Cout, 1)    f32
        cols = []
        for k, off in enumerate(offsets):
            # shifted[p] = inp[p + off]  (lane roll on the XLU), then zero the
            # positions that fall outside the image (pad=1 semantics).
            shifted = inp if off == 0 else pltpu.roll(inp, (-off) % HW, 1)
            cols.append(shifted * m_ref[k])
        # im2col: (9*C, HW) -> single MXU matmul with K = 9*C.
        im2col = jnp.concatenate(cols, axis=0).astype(jnp.bfloat16)
        acc = jnp.dot(w_ref[...], im2col, preferred_element_type=jnp.float32)
        return acc + b_ref[...]                      # (Cout, HW) f32

    def kernel(x_ref, m_ref, w1_ref, b1_ref, w2_ref, b2_ref, o_ref):
        x = x_ref[0]                                 # (Cin, HW) f32
        y1 = _leaky(conv3x3(x, m_ref, w1_ref, b1_ref))
        y2 = conv3x3(y1, m_ref, w2_ref, b2_ref)      # (Cout, HW) f32

        # AvgPool2d(2,2): 2x2 window averages via two lane rolls + VPU adds.
        # The stride-2 (top-left) selection is done in the wrapper as a strided
        # slice so the kernel's output store stays lane-dense (HW lanes).
        horiz = y2 + pltpu.roll(y2, HW - 1, 1)       # y2[p] + y2[p+1]
        pooled = 0.25 * (horiz + pltpu.roll(horiz, HW - W, 1))
        o_ref[0] = _leaky(pooled)                    # LeakyReLU commutes w/ slice

    return kernel


def _pad_masks(H, W):
    """masks[k, 0, p] = 1 iff (i+dy, j+dx) is inside the image for p = i*W+j."""
    m = np.zeros((9, 1, H * W), np.float32)
    k = 0
    for dy in (-1, 0, 1):
        for dx in (-1, 0, 1):
            for i in range(H):
                for j in range(W):
                    if 0 <= i + dy < H and 0 <= j + dx < W:
                        m[k, 0, i * W + j] = 1.0
            k += 1
    return jnp.asarray(m)


def block_forward(x_nchw, w1_oihw, b1, w2_oihw, b2):
    """Forward pass of Block. Input NCHW -> output NCHW (N, Cout, H//2, W//2)."""
    N, Cin, H, W = x_nchw.shape
    Cout = w1_oihw.shape[0]
    HW = H * W

    # equalized learning-rate scale (He constant): sqrt(2 / fan_in)
    scale1 = float(np.sqrt(2.0 / (Cin * 9)))
    scale2 = float(np.sqrt(2.0 / (Cout * 9)))

    # OIHW -> (Cout, kH, kW, Cin) -> (Cout, 9*Cin); row order (ky*3+kx)*C + ci
    # matches the tap/mask ordering in the kernel.  bf16 operands, f32 accum.
    w1_mat = jnp.transpose(w1_oihw * scale1, (0, 2, 3, 1)).reshape(Cout, 9 * Cin)
    w2_mat = jnp.transpose(w2_oihw * scale2, (0, 2, 3, 1)).reshape(Cout, 9 * Cout)
    w1_mat = w1_mat.astype(jnp.bfloat16)
    w2_mat = w2_mat.astype(jnp.bfloat16)

    # NCHW flattened = channels-on-sublanes, HW-on-lanes: no transpose needed.
    x_flat = x_nchw.reshape(N, Cin, HW).astype(jnp.float32)
    masks = _pad_masks(H, W)                                  # (9, 1, HW) f32
    b1c = b1.reshape(Cout, 1).astype(jnp.float32)
    b2c = b2.reshape(Cout, 1).astype(jnp.float32)

    flops = N * (2 * HW * 9 * Cin * Cout + 2 * HW * 9 * Cout * Cout + 6 * Cout * HW)
    bytes_accessed = (x_flat.size * 4 + masks.size * 4 + w1_mat.size * 2 +
                      w2_mat.size * 2 + (b1c.size + b2c.size) * 4 +
                      N * Cout * HW * 4)

    out_full = pl.pallas_call(
        _make_block_kernel(H, W),
        out_shape=jax.ShapeDtypeStruct((N, Cout, HW), jnp.float32),
        grid_spec=pltpu.PrefetchScalarGridSpec(
            num_scalar_prefetch=0,
            grid=(N,),                                        # 1 image / step
            in_specs=[
                pl.BlockSpec((1, Cin, HW), lambda b: (b, 0, 0)),
                pl.BlockSpec((9, 1, HW), lambda b: (0, 0, 0)),
                pl.BlockSpec((Cout, 9 * Cin), lambda b: (0, 0)),
                pl.BlockSpec((Cout, 1), lambda b: (0, 0)),
                pl.BlockSpec((Cout, 9 * Cout), lambda b: (0, 0)),
                pl.BlockSpec((Cout, 1), lambda b: (0, 0)),
            ],
            out_specs=pl.BlockSpec((1, Cout, HW), lambda b: (b, 0, 0)),
        ),
        compiler_params=pltpu.CompilerParams(
            dimension_semantics=("parallel",)),
        cost_estimate=pl.CostEstimate(flops=flops, transcendentals=0,
                                      bytes_accessed=bytes_accessed),
    )(x_flat, masks, w1_mat, b1c, w2_mat, b2c)

    # Stride-2 selection of the in-kernel 2x2 window averages; already NCHW.
    return out_full.reshape(N, Cout, H, W)[:, :, ::2, ::2]


def _reference(x_nchw, w1_oihw, b1, w2_oihw, b2):
    """Pure-JAX f32 reference matching the PyTorch module semantics."""
    Cin = x_nchw.shape[1]
    Cout = w1_oihw.shape[0]
    s1 = np.sqrt(2.0 / (Cin * 9))
    s2 = np.sqrt(2.0 / (Cout * 9))
    dn = ("NCHW", "OIHW", "NCHW")
    hi = jax.lax.Precision.HIGHEST
    y = lax.conv_general_dilated(x_nchw, w1_oihw * s1, (1, 1), ((1, 1), (1, 1)),
                                 dimension_numbers=dn, precision=hi)
    y = _leaky(y + b1[None, :, None, None])
    y = lax.conv_general_dilated(y, w2_oihw * s2, (1, 1), ((1, 1), (1, 1)),
                                 dimension_numbers=dn, precision=hi)
    y = y + b2[None, :, None, None]
    N, C, H, W = y.shape
    y = y.reshape(N, C, H // 2, 2, W // 2, 2).mean(axis=(3, 5))   # AvgPool2d(2,2)
    return _leaky(y)


if __name__ == "__main__":
    # Small shapes consistent with the module: batch=2, Cin=4, Cout=8, 16x16.
    N, Cin, Cout, H, W = 2, 4, 8, 16, 16
    key = jax.random.PRNGKey(0)
    kx, kw1, kw2 = jax.random.split(key, 3)

    x = jax.random.normal(kx, (N, Cin, H, W), jnp.float32)
    # Conv2dEqualized init: weight ~ N(0, 1) (scaled at runtime), bias = 0.
    w1 = jax.random.normal(kw1, (Cout, Cin, 3, 3), jnp.float32)
    b1 = jnp.zeros((Cout,), jnp.float32)
    w2 = jax.random.normal(kw2, (Cout, Cout, 3, 3), jnp.float32)
    b2 = jnp.zeros((Cout,), jnp.float32)

    out = jax.block_until_ready(block_forward(x, w1, b1, w2, b2))
    ref = jax.block_until_ready(_reference(x, w1, b1, w2, b2))

    assert out.shape == (N, Cout, H // 2, W // 2), out.shape
    # Kernel uses bf16 matmul operands with f32 accumulation; the reference is
    # full f32, so tolerance reflects bf16 input rounding (~0.4% relative).
    np.testing.assert_allclose(np.asarray(out), np.asarray(ref),
                               rtol=2e-2, atol=2e-2)
    print("KERNEL_OK")
</pallas_src>

<mosaic_0001>
module attributes {stable_mosaic.version = 11 : i64} {
  func.func @kernel(%arg0: i32, %arg1: memref<1x4x256xf32, #tpu.memory_space<vmem>>, %arg2: memref<9x1x256xf32, #tpu.memory_space<vmem>>, %arg3: memref<8x36xbf16, #tpu.memory_space<vmem>>, %arg4: memref<8x1xf32, #tpu.memory_space<vmem>>, %arg5: memref<8x72xbf16, #tpu.memory_space<vmem>>, %arg6: memref<8x1xf32, #tpu.memory_space<vmem>>, %arg7: memref<1x8x256xf32, #tpu.memory_space<vmem>>) attributes {dimension_semantics = [#tpu.dimension_semantics<parallel>], iteration_bounds = array<i64: 2>, scalar_prefetch = 0 : i64, scratch_operands = 0 : i64, tpu.core_type = #tpu.core_type<tc>, window_params = [{transform_indices = @transform_0, window_bounds = array<i64: 1, 4, 256>}, {pipeline_mode = #tpu.pipeline_mode<synchronous>, transform_indices = @transform_1, window_bounds = array<i64: 9, 1, 256>}, {pipeline_mode = #tpu.pipeline_mode<synchronous>, transform_indices = @transform_2, window_bounds = array<i64: 8, 36>}, {pipeline_mode = #tpu.pipeline_mode<synchronous>, transform_indices = @transform_3, window_bounds = array<i64: 8, 1>}, {pipeline_mode = #tpu.pipeline_mode<synchronous>, transform_indices = @transform_4, window_bounds = array<i64: 8, 72>}, {pipeline_mode = #tpu.pipeline_mode<synchronous>, transform_indices = @transform_5, window_bounds = array<i64: 8, 1>}, {transform_indices = @transform_6, window_bounds = array<i64: 1, 8, 256>}]} {
    %c0 = arith.constant 0 : index
    %c0_0 = arith.constant 0 : index
    %c0_1 = arith.constant 0 : index
    %0 = vector.load %arg1[%c0, %c0_0, %c0_1] : memref<1x4x256xf32, #tpu.memory_space<vmem>>, vector<1x4x256xf32>
    %1 = vector.shape_cast %0 : vector<1x4x256xf32> to vector<4x256xf32>
    %c17_i32 = arith.constant 17 : i32
    %2 = tpu.dynamic_rotate %1 by %c17_i32 dim 1 : vector<4x256xf32>, i32 -> vector<4x256xf32>
    %c0_2 = arith.constant 0 : index
    %c0_3 = arith.constant 0 : index
    %c0_4 = arith.constant 0 : index
    %3 = vector.load %arg2[%c0_2, %c0_3, %c0_4] : memref<9x1x256xf32, #tpu.memory_space<vmem>>, vector<1x1x256xf32>
    %4 = vector.shape_cast %3 : vector<1x1x256xf32> to vector<1x256xf32>
    %5 = vector.broadcast %4 : vector<1x256xf32> to vector<4x256xf32>
    %6 = arith.mulf %2, %5 : vector<4x256xf32>
    %c16_i32 = arith.constant 16 : i32
    %7 = tpu.dynamic_rotate %1 by %c16_i32 dim 1 : vector<4x256xf32>, i32 -> vector<4x256xf32>
    %c1 = arith.constant 1 : index
    %c0_5 = arith.constant 0 : index
    %c0_6 = arith.constant 0 : index
    %8 = vector.load %arg2[%c1, %c0_5, %c0_6] : memref<9x1x256xf32, #tpu.memory_space<vmem>>, vector<1x1x256xf32>
    %9 = vector.shape_cast %8 : vector<1x1x256xf32> to vector<1x256xf32>
    %10 = vector.broadcast %9 : vector<1x256xf32> to vector<4x256xf32>
    %11 = arith.mulf %7, %10 : vector<4x256xf32>
    %c15_i32 = arith.constant 15 : i32
    %12 = tpu.dynamic_rotate %1 by %c15_i32 dim 1 : vector<4x256xf32>, i32 -> vector<4x256xf32>
    %c2 = arith.constant 2 : index
    %c0_7 = arith.constant 0 : index
    %c0_8 = arith.constant 0 : index
    %13 = vector.load %arg2[%c2, %c0_7, %c0_8] : memref<9x1x256xf32, #tpu.memory_space<vmem>>, vector<1x1x256xf32>
    %14 = vector.shape_cast %13 : vector<1x1x256xf32> to vector<1x256xf32>
    %15 = vector.broadcast %14 : vector<1x256xf32> to vector<4x256xf32>
    %16 = arith.mulf %12, %15 : vector<4x256xf32>
    %c1_i32 = arith.constant 1 : i32
    %17 = tpu.dynamic_rotate %1 by %c1_i32 dim 1 : vector<4x256xf32>, i32 -> vector<4x256xf32>
    %c3 = arith.constant 3 : index
    %c0_9 = arith.constant 0 : index
    %c0_10 = arith.constant 0 : index
    %18 = vector.load %arg2[%c3, %c0_9, %c0_10] : memref<9x1x256xf32, #tpu.memory_space<vmem>>, vector<1x1x256xf32>
    %19 = vector.shape_cast %18 : vector<1x1x256xf32> to vector<1x256xf32>
    %20 = vector.broadcast %19 : vector<1x256xf32> to vector<4x256xf32>
    %21 = arith.mulf %17, %20 : vector<4x256xf32>
    %c4 = arith.constant 4 : index
    %c0_11 = arith.constant 0 : index
    %c0_12 = arith.constant 0 : index
    %22 = vector.load %arg2[%c4, %c0_11, %c0_12] : memref<9x1x256xf32, #tpu.memory_space<vmem>>, vector<1x1x256xf32>
    %23 = vector.shape_cast %22 : vector<1x1x256xf32> to vector<1x256xf32>
    %24 = vector.broadcast %23 : vector<1x256xf32> to vector<4x256xf32>
    %25 = arith.mulf %1, %24 : vector<4x256xf32>
    %c255_i32 = arith.constant 255 : i32
    %26 = tpu.dynamic_rotate %1 by %c255_i32 dim 1 : vector<4x256xf32>, i32 -> vector<4x256xf32>
    %c5 = arith.constant 5 : index
    %c0_13 = arith.constant 0 : index
    %c0_14 = arith.constant 0 : index
    %27 = vector.load %arg2[%c5, %c0_13, %c0_14] : memref<9x1x256xf32, #tpu.memory_space<vmem>>, vector<1x1x256xf32>
    %28 = vector.shape_cast %27 : vector<1x1x256xf32> to vector<1x256xf32>
    %29 = vector.broadcast %28 : vector<1x256xf32> to vector<4x256xf32>
    %30 = arith.mulf %26, %29 : vector<4x256xf32>
    %c241_i32 = arith.constant 241 : i32
    %31 = tpu.dynamic_rotate %1 by %c241_i32 dim 1 : vector<4x256xf32>, i32 -> vector<4x256xf32>
    %c6 = arith.constant 6 : index
    %c0_15 = arith.constant 0 : index
    %c0_16 = arith.constant 0 : index
    %32 = vector.load %arg2[%c6, %c0_15, %c0_16] : memref<9x1x256xf32, #tpu.memory_space<vmem>>, vector<1x1x256xf32>
    %33 = vector.shape_cast %32 : vector<1x1x256xf32> to vector<1x256xf32>
    %34 = vector.broadcast %33 : vector<1x256xf32> to vector<4x256xf32>
    %35 = arith.mulf %31, %34 : vector<4x256xf32>
    %c240_i32 = arith.constant 240 : i32
    %36 = tpu.dynamic_rotate %1 by %c240_i32 dim 1 : vector<4x256xf32>, i32 -> vector<4x256xf32>
    %c7 = arith.constant 7 : index
    %c0_17 = arith.constant 0 : index
    %c0_18 = arith.constant 0 : index
    %37 = vector.load %arg2[%c7, %c0_17, %c0_18] : memref<9x1x256xf32, #tpu.memory_space<vmem>>, vector<1x1x256xf32>
    %38 = vector.shape_cast %37 : vector<1x1x256xf32> to vector<1x256xf32>
    %39 = vector.broadcast %38 : vector<1x256xf32> to vector<4x256xf32>
    %40 = arith.mulf %36, %39 : vector<4x256xf32>
    %c239_i32 = arith.constant 239 : i32
    %41 = tpu.dynamic_rotate %1 by %c239_i32 dim 1 : vector<4x256xf32>, i32 -> vector<4x256xf32>
    %c8 = arith.constant 8 : index
    %c0_19 = arith.constant 0 : index
    %c0_20 = arith.constant 0 : index
    %42 = vector.load %arg2[%c8, %c0_19, %c0_20] : memref<9x1x256xf32, #tpu.memory_space<vmem>>, vector<1x1x256xf32>
    %43 = vector.shape_cast %42 : vector<1x1x256xf32> to vector<1x256xf32>
    %44 = vector.broadcast %43 : vector<1x256xf32> to vector<4x256xf32>
    %45 = arith.mulf %41, %44 : vector<4x256xf32>
    %46 = tpu.concatenate %6, %11, %16, %21, %25, %30, %35, %40, %45 in 0 : vector<4x256xf32>, vector<4x256xf32>, vector<4x256xf32>, vector<4x256xf32>, vector<4x256xf32>, vector<4x256xf32>, vector<4x256xf32>, vector<4x256xf32>, vector<4x256xf32> -> vector<36x256xf32>
    %47 = arith.truncf %46 : vector<36x256xf32> to vector<36x256xbf16>
    %c0_21 = arith.constant 0 : index
    %c0_22 = arith.constant 0 : index
    %48 = vector.load %arg3[%c0_21, %c0_22] : memref<8x36xbf16, #tpu.memory_space<vmem>>, vector<8x36xbf16>
    %cst = arith.constant dense<0.000000e+00> : vector<8x256xf32>
    %49 = tpu.matmul %48, %47, %cst {dimension_numbers = #tpu.dot_dimension_numbers<[1], [0], [0], [1], [0, 0, 1, 1], [], []>} : vector<8x36xbf16>, vector<36x256xbf16>, vector<8x256xf32> -> vector<8x256xf32>
    %c0_23 = arith.constant 0 : index
    %c0_24 = arith.constant 0 : index
    %50 = vector.load %arg4[%c0_23, %c0_24] : memref<8x1xf32, #tpu.memory_space<vmem>>, vector<8x1xf32>
    %51 = vector.broadcast %50 : vector<8x1xf32> to vector<8x256xf32>
    %52 = arith.addf %49, %51 : vector<8x256xf32>
    %cst_25 = arith.constant 0.000000e+00 : f32
    %53 = vector.broadcast %cst_25 : f32 to vector<8x256xf32>
    %54 = arith.cmpf ogt, %52, %53 : vector<8x256xf32>
    %cst_26 = arith.constant 2.000000e-01 : f32
    %55 = vector.broadcast %cst_26 : f32 to vector<8x256xf32>
    %56 = arith.mulf %55, %52 : vector<8x256xf32>
    %57 = arith.select %54, %52, %56 : vector<8x256xi1>, vector<8x256xf32>
    %c17_i32_27 = arith.constant 17 : i32
    %58 = tpu.dynamic_rotate %57 by %c17_i32_27 dim 1 : vector<8x256xf32>, i32 -> vector<8x256xf32>
    %c0_28 = arith.constant 0 : index
    %c0_29 = arith.constant 0 : index
    %c0_30 = arith.constant 0 : index
    %59 = vector.load %arg2[%c0_28, %c0_29, %c0_30] : memref<9x1x256xf32, #tpu.memory_space<vmem>>, vector<1x1x256xf32>
    %60 = vector.shape_cast %59 : vector<1x1x256xf32> to vector<1x256xf32>
    %61 = vector.broadcast %60 : vector<1x256xf32> to vector<8x256xf32>
    %62 = arith.mulf %58, %61 : vector<8x256xf32>
    %c16_i32_31 = arith.constant 16 : i32
    %63 = tpu.dynamic_rotate %57 by %c16_i32_31 dim 1 : vector<8x256xf32>, i32 -> vector<8x256xf32>
    %c1_32 = arith.constant 1 : index
    %c0_33 = arith.constant 0 : index
    %c0_34 = arith.constant 0 : index
    %64 = vector.load %arg2[%c1_32, %c0_33, %c0_34] : memref<9x1x256xf32, #tpu.memory_space<vmem>>, vector<1x1x256xf32>
    %65 = vector.shape_cast %64 : vector<1x1x256xf32> to vector<1x256xf32>
    %66 = vector.broadcast %65 : vector<1x256xf32> to vector<8x256xf32>
    %67 = arith.mulf %63, %66 : vector<8x256xf32>
    %c15_i32_35 = arith.constant 15 : i32
    %68 = tpu.dynamic_rotate %57 by %c15_i32_35 dim 1 : vector<8x256xf32>, i32 -> vector<8x256xf32>
    %c2_36 = arith.constant 2 : index
    %c0_37 = arith.constant 0 : index
    %c0_38 = arith.constant 0 : index
    %69 = vector.load %arg2[%c2_36, %c0_37, %c0_38] : memref<9x1x256xf32, #tpu.memory_space<vmem>>, vector<1x1x256xf32>
    %70 = vector.shape_cast %69 : vector<1x1x256xf32> to vector<1x256xf32>
    %71 = vector.broadcast %70 : vector<1x256xf32> to vector<8x256xf32>
    %72 = arith.mulf %68, %71 : vector<8x256xf32>
    %c1_i32_39 = arith.constant 1 : i32
    %73 = tpu.dynamic_rotate %57 by %c1_i32_39 dim 1 : vector<8x256xf32>, i32 -> vector<8x256xf32>
    %c3_40 = arith.constant 3 : index
    %c0_41 = arith.constant 0 : index
    %c0_42 = arith.constant 0 : index
    %74 = vector.load %arg2[%c3_40, %c0_41, %c0_42] : memref<9x1x256xf32, #tpu.memory_space<vmem>>, vector<1x1x256xf32>
    %75 = vector.shape_cast %74 : vector<1x1x256xf32> to vector<1x256xf32>
    %76 = vector.broadcast %75 : vector<1x256xf32> to vector<8x256xf32>
    %77 = arith.mulf %73, %76 : vector<8x256xf32>
    %c4_43 = arith.constant 4 : index
    %c0_44 = arith.constant 0 : index
    %c0_45 = arith.constant 0 : index
    %78 = vector.load %arg2[%c4_43, %c0_44, %c0_45] : memref<9x1x256xf32, #tpu.memory_space<vmem>>, vector<1x1x256xf32>
    %79 = vector.shape_cast %78 : vector<1x1x256xf32> to vector<1x256xf32>
    %80 = vector.broadcast %79 : vector<1x256xf32> to vector<8x256xf32>
    %81 = arith.mulf %57, %80 : vector<8x256xf32>
    %c255_i32_46 = arith.constant 255 : i32
    %82 = tpu.dynamic_rotate %57 by %c255_i32_46 dim 1 : vector<8x256xf32>, i32 -> vector<8x256xf32>
    %c5_47 = arith.constant 5 : index
    %c0_48 = arith.constant 0 : index
    %c0_49 = arith.constant 0 : index
    %83 = vector.load %arg2[%c5_47, %c0_48, %c0_49] : memref<9x1x256xf32, #tpu.memory_space<vmem>>, vector<1x1x256xf32>
    %84 = vector.shape_cast %83 : vector<1x1x256xf32> to vector<1x256xf32>
    %85 = vector.broadcast %84 : vector<1x256xf32> to vector<8x256xf32>
    %86 = arith.mulf %82, %85 : vector<8x256xf32>
    %c241_i32_50 = arith.constant 241 : i32
    %87 = tpu.dynamic_rotate %57 by %c241_i32_50 dim 1 : vector<8x256xf32>, i32 -> vector<8x256xf32>
    %c6_51 = arith.constant 6 : index
    %c0_52 = arith.constant 0 : index
    %c0_53 = arith.constant 0 : index
    %88 = vector.load %arg2[%c6_51, %c0_52, %c0_53] : memref<9x1x256xf32, #tpu.memory_space<vmem>>, vector<1x1x256xf32>
    %89 = vector.shape_cast %88 : vector<1x1x256xf32> to vector<1x256xf32>
    %90 = vector.broadcast %89 : vector<1x256xf32> to vector<8x256xf32>
    %91 = arith.mulf %87, %90 : vector<8x256xf32>
    %c240_i32_54 = arith.constant 240 : i32
    %92 = tpu.dynamic_rotate %57 by %c240_i32_54 dim 1 : vector<8x256xf32>, i32 -> vector<8x256xf32>
    %c7_55 = arith.constant 7 : index
    %c0_56 = arith.constant 0 : index
    %c0_57 = arith.constant 0 : index
    %93 = vector.load %arg2[%c7_55, %c0_56, %c0_57] : memref<9x1x256xf32, #tpu.memory_space<vmem>>, vector<1x1x256xf32>
    %94 = vector.shape_cast %93 : vector<1x1x256xf32> to vector<1x256xf32>
    %95 = vector.broadcast %94 : vector<1x256xf32> to vector<8x256xf32>
    %96 = arith.mulf %92, %95 : vector<8x256xf32>
    %c239_i32_58 = arith.constant 239 : i32
    %97 = tpu.dynamic_rotate %57 by %c239_i32_58 dim 1 : vector<8x256xf32>, i32 -> vector<8x256xf32>
    %c8_59 = arith.constant 8 : index
    %c0_60 = arith.constant 0 : index
    %c0_61 = arith.constant 0 : index
    %98 = vector.load %arg2[%c8_59, %c0_60, %c0_61] : memref<9x1x256xf32, #tpu.memory_space<vmem>>, vector<1x1x256xf32>
    %99 = vector.shape_cast %98 : vector<1x1x256xf32> to vector<1x256xf32>
    %100 = vector.broadcast %99 : vector<1x256xf32> to vector<8x256xf32>
    %101 = arith.mulf %97, %100 : vector<8x256xf32>
    %102 = tpu.concatenate %62, %67, %72, %77, %81, %86, %91, %96, %101 in 0 : vector<8x256xf32>, vector<8x256xf32>, vector<8x256xf32>, vector<8x256xf32>, vector<8x256xf32>, vector<8x256xf32>, vector<8x256xf32>, vector<8x256xf32>, vector<8x256xf32> -> vector<72x256xf32>
    %103 = arith.truncf %102 : vector<72x256xf32> to vector<72x256xbf16>
    %c0_62 = arith.constant 0 : index
    %c0_63 = arith.constant 0 : index
    %104 = vector.load %arg5[%c0_62, %c0_63] : memref<8x72xbf16, #tpu.memory_space<vmem>>, vector<8x72xbf16>
    %cst_64 = arith.constant dense<0.000000e+00> : vector<8x256xf32>
    %105 = tpu.matmul %104, %103, %cst_64 {dimension_numbers = #tpu.dot_dimension_numbers<[1], [0], [0], [1], [0, 0, 1, 1], [], []>} : vector<8x72xbf16>, vector<72x256xbf16>, vector<8x256xf32> -> vector<8x256xf32>
    %c0_65 = arith.constant 0 : index
    %c0_66 = arith.constant 0 : index
    %106 = vector.load %arg6[%c0_65, %c0_66] : memref<8x1xf32, #tpu.memory_space<vmem>>, vector<8x1xf32>
    %107 = vector.broadcast %106 : vector<8x1xf32> to vector<8x256xf32>
    %108 = arith.addf %105, %107 : vector<8x256xf32>
    %c255_i32_67 = arith.constant 255 : i32
    %109 = tpu.dynamic_rotate %108 by %c255_i32_67 dim 1 : vector<8x256xf32>, i32 -> vector<8x256xf32>
    %110 = arith.addf %108, %109 : vector<8x256xf32>
    %c240_i32_68 = arith.constant 240 : i32
    %111 = tpu.dynamic_rotate %110 by %c240_i32_68 dim 1 : vector<8x256xf32>, i32 -> vector<8x256xf32>
    %112 = arith.addf %110, %111 : vector<8x256xf32>
    %cst_69 = arith.constant 2.500000e-01 : f32
    %113 = vector.broadcast %cst_69 : f32 to vector<8x256xf32>
    %114 = arith.mulf %113, %112 : vector<8x256xf32>
    %cst_70 = arith.constant 0.000000e+00 : f32
    %115 = vector.broadcast %cst_70 : f32 to vector<8x256xf32>
    %116 = arith.cmpf ogt, %114, %115 : vector<8x256xf32>
    %cst_71 = arith.constant 2.000000e-01 : f32
    %117 = vector.broadcast %cst_71 : f32 to vector<8x256xf32>
    %118 = arith.mulf %117, %114 : vector<8x256xf32>
    %119 = arith.select %116, %114, %118 : vector<8x256xi1>, vector<8x256xf32>
    %c0_72 = arith.constant 0 : index
    %c0_73 = arith.constant 0 : index
    %c0_74 = arith.constant 0 : index
    %120 = vector.load %arg7[%c0_72, %c0_73, %c0_74] : memref<1x8x256xf32, #tpu.memory_space<vmem>>, vector<1x8x256xf32>
    %121 = vector.shape_cast %120 : vector<1x8x256xf32> to vector<8x256xf32>
    %122 = vector.shape_cast %119 : vector<8x256xf32> to vector<1x8x256xf32>
    tpu.vector_store %arg7[%c0_72, %c0_73, %c0_74], %122 {strides = array<i32>} : memref<1x8x256xf32, #tpu.memory_space<vmem>>, vector<1x8x256xf32>,
    return
  }
  func.func @transform_0(%arg0: i32) -> (i32, i32, i32) {
    %c0_i32 = arith.constant 0 : i32
    %c0_i32_0 = arith.constant 0 : i32
    %c0_i32_1 = arith.constant 0 : i32
    return %arg0, %c0_i32, %c0_i32_0 : i32, i32, i32
  }
  func.func @transform_1(%arg0: i32) -> (i32, i32, i32) {
    %c0_i32 = arith.constant 0 : i32
    %c0_i32_0 = arith.constant 0 : i32
    %c0_i32_1 = arith.constant 0 : i32
    %c0_i32_2 = arith.constant 0 : i32
    return %c0_i32, %c0_i32_0, %c0_i32_1 : i32, i32, i32
  }
  func.func @transform_2(%arg0: i32) -> (i32, i32) {
    %c0_i32 = arith.constant 0 : i32
    %c0_i32_0 = arith.constant 0 : i32
    %c0_i32_1 = arith.constant 0 : i32
    return %c0_i32, %c0_i32_0 : i32, i32
  }
  func.func @transform_3(%arg0: i32) -> (i32, i32) {
    %c0_i32 = arith.constant 0 : i32
    %c0_i32_0 = arith.constant 0 : i32
    %c0_i32_1 = arith.constant 0 : i32
    return %c0_i32, %c0_i32_0 : i32, i32
  }
  func.func @transform_4(%arg0: i32) -> (i32, i32) {
    %c0_i32 = arith.constant 0 : i32
    %c0_i32_0 = arith.constant 0 : i32
    %c0_i32_1 = arith.constant 0 : i32
    return %c0_i32, %c0_i32_0 : i32, i32
  }
  func.func @transform_5(%arg0: i32) -> (i32, i32) {
    %c0_i32 = arith.constant 0 : i32
    %c0_i32_0 = arith.constant 0 : i32
    %c0_i32_1 = arith.constant 0 : i32
    return %c0_i32, %c0_i32_0 : i32, i32
  }
  func.func @transform_6(%arg0: i32) -> (i32, i32, i32) {
    %c0_i32 = arith.constant 0 : i32
    %c0_i32_0 = arith.constant 0 : i32
    %c0_i32_1 = arith.constant 0 : i32
    return %arg0, %c0_i32, %c0_i32_0 : i32, i32, i32
  }
}

</mosaic_0001>

<llo_original>
// kernel: tpu_custom_call.1
$region0: #{tpu_custom_call.1}
  #allocation0 [shape = 'u32[]', space=smem, size = 0x4, offset = 0x4, fixed_abs, tag = 'smem constant byte address 0x4 - core index']
  #allocation1 [shape = 'u32[144,128]{1,0:T(1,128)}', space=vmem, size = 0x12000, scoped, tag = 'internal scratch']
  %s0 = inlined_call_operand.hbm [shape: f32[2,4,256], index: 0, kind: input, shape index: {}]
  %s1 = inlined_call_operand.vmem [shape: f32[9,1,256], index: 1, kind: input, shape index: {}]
  %s2 = inlined_call_operand.hbm [shape: bf16[8,36], index: 2, kind: input, shape index: {}]
  %s3 = inlined_call_operand.vmem [shape: f32[8,1], index: 3, kind: input, shape index: {}]
  %s4 = inlined_call_operand.vmem [shape: bf16[8,72], index: 4, kind: input, shape index: {}]
  %s5 = inlined_call_operand.vmem [shape: f32[8,1], index: 5, kind: input, shape index: {}]
  %s6 = inlined_call_operand.hbm [shape: f32[2,8,256], index: 6, kind: output, shape index: {}]
  %s7 = sld [smem:[#allocation0]]
  $region65: #{tpu_custom_call.1} parent=0
    _
  %s9 = ssub.s32 1, %s7
  %s10 = scalar_select 0, %s9, %s7
  $region1: #{tpu_custom_call.1} parent=0
    #allocation2 [shape = 'u8[8192]{0}', space=vmem, size = 0x2000, scoped, tag = 'input window, operand 0']
    #allocation3 [shape = 's32[2]{0}', space=sflag, size = 0x8, scoped, tag = 'scoped memory for tpu_custom_call.1']
    #allocation4 [shape = 's32[2]{0}', space=sflag, size = 0x8, scoped, tag = 'scoped memory for tpu_custom_call.1']
    #allocation5 [shape = 'u8[2048]{0}', space=vmem, size = 0x800, scoped, tag = 'input window, operand 2, single buffered']
    #allocation6 [shape = 's32[1]{0}', space=sflag, size = 0x4, scoped, tag = 'scoped memory for tpu_custom_call.1']
    #allocation7 [shape = 'u8[16384]{0}', space=vmem, size = 0x4000, scoped, tag = 'output window, operand 0']
    %11 = vsyncpa [#allocation3], 0
    %s12 = scalar_lea.sflag [#allocation3], 1
    %13 = vsyncpa %s12, 0
    %14 = vsyncpa [#allocation6], 0
    %15 = vsyncpa [#allocation4], 0
    %s16 = scalar_lea.sflag [#allocation4], 1
    %17 = vsyncpa %s16, 0
    loop: start=0, step=1, limit=4
    $region2: #{tpu_custom_call.1} parent=1 // loop_pre_header
      _
    $region3: #{tpu_custom_call.1} parent=1 // loop_header
      %s19 = sphi 0, %s23
      %p20 = scmp.ge.s32.totalorder %s19, 4
      %s29 = sphi 0, %s31
      %s32 = sphi 0, %s29
      %s33 = sphi 0, %s32
      %s49 = sphi 0, %s33
      %s53 = sphi 0, %s53
      %s55 = sphi 0, %s53
      %s56 = sphi 0, %s55
      %s70 = sphi 0, %s56
      %s74 = sphi 0, %s74
      %s76 = sphi 0, %s74
      %s77 = sphi 0, %s76
      %s91 = sphi 0, %s77
      %s95 = sphi 0, %s95
      %s97 = sphi 0, %s95
      %s98 = sphi 0, %s97
      %s112 = sphi 0, %s98
      %s116 = sphi 0, %s116
      %s118 = sphi 0, %s116
      %s119 = sphi 0, %s118
      %s133 = sphi 0, %s119
      %s137 = sphi 0, %s137
      %s139 = sphi 0, %s137
      %s140 = sphi 0, %s139
      %s154 = sphi 0, %s140
      %s160 = sphi 0, %s162
      %s163 = sphi 0, %s160
      %s164 = sphi 0, %s163
      %s180 = sphi 0, %s164
    $region4: #{tpu_custom_call.1} parent=1 // loop_header_branch
      %22 = sbr.rel (%p20) target = $region8
    $region5: #{tpu_custom_call.1} parent=1 // loop_body
      %s24 = ssub.s32 %s19, 1
      %s25 = ssub.s32 %s19, 2
      %s26 = sadd.s32 %s19, 1
      %s27 = ssub.s32 %s19, %s26
      %p28 = scmp.eq.s32.totalorder %s27, 0
      %s30 = sadd.s32 %s29, 1
      %s31 = scalar_select %p28, %s29, %s30
      %p34 = pneg %p28
      %p35 = scmp.eq.s32.totalorder %s19, 1
      %p36 = por %p34, %p35
      %p37 = scmp.ne.s32.totalorder %s29, %s32
      %p38 = scmp.eq.s32.totalorder %s19, 0
      %p39 = por %p37, %p38
      %p40 = scmp.ne.s32.totalorder %s29, %s32
      %p41 = scmp.eq.s32.totalorder %s24, 1
      %p42 = por %p40, %p41
      %p43 = scmp.ne.s32.totalorder %s32, %s33
      %p44 = scmp.eq.s32.totalorder %s24, 0
      %p45 = por %p43, %p44
      %p46 = scmp.ne.s32.totalorder %s32, %s33
      %p47 = scmp.eq.s32.totalorder %s25, 1
      %p48 = por %p46, %p47
      %p50 = scmp.ne.s32.totalorder %s33, %s49
      %p51 = scmp.eq.s32.totalorder %s25, 0
      %p52 = por %p50, %p51
      %s54 = sadd.s32 %s53, 1
      %p57 = scmp.eq.s32.totalorder %s19, 1
      %p58 = scmp.ne.s32.totalorder %s53, %s55
      %p59 = scmp.eq.s32.totalorder %s19, 0
      %p60 = por %p58, %p59
      %p61 = scmp.ne.s32.totalorder %s53, %s55
      %p62 = scmp.eq.s32.totalorder %s24, 1
      %p63 = por %p61, %p62
      %p64 = scmp.ne.s32.totalorder %s55, %s56
      %p65 = scmp.eq.s32.totalorder %s24, 0
      %p66 = por %p64, %p65
      %p67 = scmp.ne.s32.totalorder %s55, %s56
      %p68 = scmp.eq.s32.totalorder %s25, 1
      %p69 = por %p67, %p68
      %p71 = scmp.ne.s32.totalorder %s56, %s70
      %p72 = scmp.eq.s32.totalorder %s25, 0
      %p73 = por %p71, %p72
      %s75 = sadd.s32 %s74, 1
      %p78 = scmp.eq.s32.totalorder %s19, 1
      %p79 = scmp.ne.s32.totalorder %s74, %s76
      %p80 = scmp.eq.s32.totalorder %s19, 0
      %p81 = por %p79, %p80
      %p82 = scmp.ne.s32.totalorder %s74, %s76
      %p83 = scmp.eq.s32.totalorder %s24, 1
      %p84 = por %p82, %p83
      %p85 = scmp.ne.s32.totalorder %s76, %s77
      %p86 = scmp.eq.s32.totalorder %s24, 0
      %p87 = por %p85, %p86
      %p88 = scmp.ne.s32.totalorder %s76, %s77
      %p89 = scmp.eq.s32.totalorder %s25, 1
      %p90 = por %p88, %p89
      %p92 = scmp.ne.s32.totalorder %s77, %s91
      %p93 = scmp.eq.s32.totalorder %s25, 0
      %p94 = por %p92, %p93
      %s96 = sadd.s32 %s95, 1
      %p99 = scmp.eq.s32.totalorder %s19, 1
      %p100 = scmp.ne.s32.totalorder %s95, %s97
      %p101 = scmp.eq.s32.totalorder %s19, 0
      %p102 = por %p100, %p101
      %p103 = scmp.ne.s32.totalorder %s95, %s97
      %p104 = scmp.eq.s32.totalorder %s24, 1
      %p105 = por %p103, %p104
      %p106 = scmp.ne.s32.totalorder %s97, %s98
      %p107 = scmp.eq.s32.totalorder %s24, 0
      %p108 = por %p106, %p107
      %p109 = scmp.ne.s32.totalorder %s97, %s98
      %p110 = scmp.eq.s32.totalorder %s25, 1
      %p111 = por %p109, %p110
      %p113 = scmp.ne.s32.totalorder %s98, %s112
      %p114 = scmp.eq.s32.totalorder %s25, 0
      %p115 = por %p113, %p114
      %s117 = sadd.s32 %s116, 1
      %p120 = scmp.eq.s32.totalorder %s19, 1
      %p121 = scmp.ne.s32.totalorder %s116, %s118
      %p122 = scmp.eq.s32.totalorder %s19, 0
      %p123 = por %p121, %p122
      %p124 = scmp.ne.s32.totalorder %s116, %s118
      %p125 = scmp.eq.s32.totalorder %s24, 1
      %p126 = por %p124, %p125
      %p127 = scmp.ne.s32.totalorder %s118, %s119
      %p128 = scmp.eq.s32.totalorder %s24, 0
      %p129 = por %p127, %p128
      %p130 = scmp.ne.s32.totalorder %s118, %s119
      %p131 = scmp.eq.s32.totalorder %s25, 1
      %p132 = por %p130, %p131
      %p134 = scmp.ne.s32.totalorder %s119, %s133
      %p135 = scmp.eq.s32.totalorder %s25, 0
      %p136 = por %p134, %p135
      %s138 = sadd.s32 %s137, 1
      %p141 = scmp.eq.s32.totalorder %s19, 1
      %p142 = scmp.ne.s32.totalorder %s137, %s139
      %p143 = scmp.eq.s32.totalorder %s19, 0
      %p144 = por %p142, %p143
      %p145 = scmp.ne.s32.totalorder %s137, %s139
      %p146 = scmp.eq.s32.totalorder %s24, 1
      %p147 = por %p145, %p146
      %p148 = scmp.ne.s32.totalorder %s139, %s140
      %p149 = scmp.eq.s32.totalorder %s24, 0
      %p150 = por %p148, %p149
      %p151 = scmp.ne.s32.totalorder %s139, %s140
      %p152 = scmp.eq.s32.totalorder %s25, 1
      %p153 = por %p151, %p152
      %p155 = scmp.ne.s32.totalorder %s140, %s154
      %p156 = scmp.eq.s32.totalorder %s25, 0
      %p157 = por %p155, %p156
      %s158 = ssub.s32 %s19, %s26
      %p159 = scmp.eq.s32.totalorder %s158, 0
      %s161 = sadd.s32 %s160, 1
      %s162 = scalar_select %p159, %s160, %s161
      %p165 = pneg %p159
      %p166 = scmp.eq.s32.totalorder %s19, 1
      %p167 = por %p165, %p166
      %p168 = scmp.ne.s32.totalorder %s160, %s163
      %p169 = scmp.eq.s32.totalorder %s19, 0
      %p170 = por %p168, %p169
      %p171 = scmp.ne.s32.totalorder %s160, %s163
      %p172 = scmp.eq.s32.totalorder %s24, 1
      %p173 = por %p171, %p172
      %p174 = scmp.ne.s32.totalorder %s163, %s164
      %p175 = scmp.eq.s32.totalorder %s24, 0
      %p176 = por %p174, %p175
      %p177 = scmp.ne.s32.totalorder %s163, %s164
      %p178 = scmp.eq.s32.totalorder %s25, 1
      %p179 = por %p177, %p178
      %p181 = scmp.ne.s32.totalorder %s164, %s180
      %p182 = scmp.eq.s32.totalorder %s25, 0
      %p183 = por %p181, %p182
      %p184 = scmp.le.s32.totalorder 1, %s19
      %p185 = scmp.lt.s32.totalorder %s19, 3
      %p186 = pnand %p184, %p185
      %p187 = pneg %p186
      // Predicated region
      $region9: #{tpu_custom_call.1} parent=5 // pred_check
        _
      $region10: #{tpu_custom_call.1} parent=5 // pred_check_branch
        %189 = sbr.rel (%p186) target = $region12
      $region11: #{tpu_custom_call.1} parent=5 // pred_region
        %s190 = ssub.s32 %s19, 1
        // Predicated region
        $region13: #{tpu_custom_call.1} parent=11 // pred_check
          %p191 = pneg %p66
        $region14: #{tpu_custom_call.1} parent=11 // pred_check_branch
          %193 = sbr.rel (%p191) target = $region16
        $region15: #{tpu_custom_call.1} parent=11 // pred_region
          _
        $region16: #{tpu_custom_call.1} parent=11 // pred_fallthru
          _
        // Predicated region
        $region17: #{tpu_custom_call.1} parent=11 // pred_check
          %p194 = pneg %p87
        $region18: #{tpu_custom_call.1} parent=11 // pred_check_branch
          %196 = sbr.rel (%p194) target = $region20
        $region19: #{tpu_custom_call.1} parent=11 // pred_region
          %s198 = ssub.s32 64, 64
          %199 = vsyncadd [#allocation6], %s198
          %s201 = sshll.u32 [#allocation5], 4
          %s202 = int_to_ptr.vmem [resolvable:$true] %s201
          %204 = dma.hbm_to_vmem [thread:$0]  %s2, 64, %s202, [#allocation6]
        $region20: #{tpu_custom_call.1} parent=11 // pred_fallthru
          _
        // Predicated region
        $region21: #{tpu_custom_call.1} parent=11 // pred_check
          %p205 = pneg %p108
        $region22: #{tpu_custom_call.1} parent=11 // pred_check_branch
          %207 = sbr.rel (%p205) target = $region24
        $region23: #{tpu_custom_call.1} parent=11 // pred_region
          _
        $region24: #{tpu_custom_call.1} parent=11 // pred_fallthru
          _
        // Predicated region
        $region25: #{tpu_custom_call.1} parent=11 // pred_check
          %p208 = pneg %p129
        $region26: #{tpu_custom_call.1} parent=11 // pred_check_branch
          %210 = sbr.rel (%p208) target = $region28
        $region27: #{tpu_custom_call.1} parent=11 // pred_region
          _
        $region28: #{tpu_custom_call.1} parent=11 // pred_fallthru
          _
        // Predicated region
        $region29: #{tpu_custom_call.1} parent=11 // pred_check
          %p211 = pneg %p150
        $region30: #{tpu_custom_call.1} parent=11 // pred_check_branch
          %213 = sbr.rel (%p211) target = $region32
        $region31: #{tpu_custom_call.1} parent=11 // pred_region
          _
        $region32: #{tpu_custom_call.1} parent=11 // pred_fallthru
          _
      $region12: #{tpu_custom_call.1} parent=5 // pred_fallthru
        _
      %p214 = scmp.lt.s32.totalorder %s19, 2
      // Predicated region
      $region33: #{tpu_custom_call.1} parent=5 // pred_check
        %p215 = pneg %p214
      $region34: #{tpu_custom_call.1} parent=5 // pred_check_branch
        %217 = sbr.rel (%p215) target = $region36
      $region35: #{tpu_custom_call.1} parent=5 // pred_region
        // Predicated region
        $region37: #{tpu_custom_call.1} parent=35 // pred_check
          %p218 = pneg %p39
        $region38: #{tpu_custom_call.1} parent=35 // pred_check_branch
          %220 = sbr.rel (%p218) target = $region40
        $region39: #{tpu_custom_call.1} parent=35 // pred_region
          %s221 = sand.u32 %s29, 1
          %s222 = scalar_lea.sflag [#allocation3], %s221
          %s223 = sand.u32 %s29, 1
          %s224 = smul.addr %s223, 8
          %s225 = scalar_lea.vmem [#allocation2], %s224
          %s227 = ssub.s32 128, 128
          %228 = vsyncadd %s222, %s227
          %s229 = smul.addr %s19, 2
          %s230 = smul.addr %s229, 64
          %s231 = scalar_lea.hbm %s0, %s230
          %s233 = sshll.u32 %s225, 4
          %s234 = int_to_ptr.vmem [resolvable:$true] %s233
          %236 = dma.hbm_to_vmem [thread:$0]  %s231, 128, %s234, %s222
        $region40: #{tpu_custom_call.1} parent=35 // pred_fallthru
          _
      $region36: #{tpu_custom_call.1} parent=5 // pred_fallthru
        _
      %p237 = scmp.le.s32.totalorder 1, %s19
      %p238 = scmp.lt.s32.totalorder %s19, 3
      %p239 = pnand %p237, %p238
      %p240 = pneg %p239
      // Predicated region
      $region41: #{tpu_custom_call.1} parent=5 // pred_check
        _
      $region42: #{tpu_custom_call.1} parent=5 // pred_check_branch
        %242 = sbr.rel (%p239) target = $region44
      $region43: #{tpu_custom_call.1} parent=5 // pred_region
        %s243 = ssub.s32 %s19, 1
        %s244 = sand.u32 %s32, 1
        %s245 = scalar_lea.sflag [#allocation3], %s244
        %s246 = sand.u32 %s32, 1
        %s247 = smul.addr %s246, 8
        %s248 = scalar_lea.vmem [#allocation2], %s247
        // Predicated region
        $region45: #{tpu_custom_call.1} parent=43 // pred_check
          %p249 = pneg %p45
        $region46: #{tpu_custom_call.1} parent=43 // pred_check_branch
          %251 = sbr.rel (%p249) target = $region48
        $region47: #{tpu_custom_call.1} parent=43 // pred_region
          %252 = dma.done %s245, 128
        $region48: #{tpu_custom_call.1} parent=43 // pred_fallthru
          _
        // Predicated region
        $region49: #{tpu_custom_call.1} parent=43 // pred_check
          %p253 = pneg %p87
        $region50: #{tpu_custom_call.1} parent=43 // pred_check_branch
          %255 = sbr.rel (%p253) target = $region52
        $region51: #{tpu_custom_call.1} parent=43 // pred_region
          %256 = dma.done [#allocation6], 64
        $region52: #{tpu_custom_call.1} parent=43 // pred_fallthru
          _
        %s257 = sand.u32 %s32, 1
        %s258 = scalar_lea.sflag [#allocation3], %s257
        %s259 = sand.u32 %s32, 1
        %s260 = smul.addr %s259, 8
        %s261 = scalar_lea.vmem [#allocation2], %s260
        %p262 = pneg %p45
        %p263 = pneg %p42
        %p264 = pneg %p66
        %p265 = pneg %p63
        %p266 = pneg %p87
        %p267 = pneg %p84
        %p268 = pneg %p108
        %p269 = pneg %p105
        %p270 = pneg %p129
        %p271 = pneg %p126
        %p272 = pneg %p150
        %p273 = pneg %p147
        %p274 = pneg %p176
        %p275 = pneg %p173
        %s276 = sand.u32 %s163, 1
        %s277 = scalar_lea.sflag [#allocation4], %s276
        %s278 = sand.u32 %s163, 1
        %s279 = smul.addr %s278, 16
        %s280 = scalar_lea.vmem [#allocation7], %s279
        %v282 = vld [vmem:[%s248] sm:$0xff]
        %v284 = vcombine.high %v282, %v282
        %286 = vrot.lane.b32.xlu0 %v282, 17
        %v287 = vpop.permute.xlu0 %286
        %288 = vrot.lane.b32.xlu0 %v284, 17
        %v289 = vpop.permute.xlu0 %288
        %v290 = vlaneseq
        %v291 = vand.u32 %v290, 127
        %vm292 = vcmp.lt.s32.totalorder %v291, 17
        %v293 = vsel %vm292, %v287, %v289
        %v294 = vsel %vm292, %v289, %v287
        %v295 = vld [vmem:[%s1] sm:$0x3]
        %v297 = vlaneseq
        %v298 = vshrl.u32 %v297, 7
        %v299 = vsub.s32 0, %v298
        %v300 = vrot.slane %v295, %v299
        %v301 = vlaneseq
        %v302 = vshrl.u32 %v301, 7
        %v303 = vsub.s32 1, %v302
        %v304 = vrot.slane %v295, %v303
        %v307 = vmul.f32 %v294, %v300
        %v308 = vmul.f32 %v293, %v304
        %309 = vrot.lane.b32.xlu0 %v282, 16
        %v310 = vpop.permute.xlu0 %309
        %311 = vrot.lane.b32.xlu0 %v284, 16
        %v312 = vpop.permute.xlu0 %311
        %vm313 = vcmp.lt.s32.totalorder %v291, 16
        %v314 = vsel %vm313, %v310, %v312
        %v315 = vsel %vm313, %v312, %v310
        %s316 = scalar_lea.vmem %s1, 2
        %v317 = vld [vmem:[%s316] sm:$0x3]
        %v319 = vlaneseq
        %v320 = vshrl.u32 %v319, 7
        %v321 = vsub.s32 0, %v320
        %v322 = vrot.slane %v317, %v321
        %v323 = vlaneseq
        %v324 = vshrl.u32 %v323, 7
        %v325 = vsub.s32 1, %v324
        %v326 = vrot.slane %v317, %v325
        %v329 = vmul.f32 %v315, %v322
        %v330 = vmul.f32 %v314, %v326
        %331 = vrot.lane.b32.xlu0 %v282, 15
        %v332 = vpop.permute.xlu0 %331
        %333 = vrot.lane.b32.xlu0 %v284, 15
        %v334 = vpop.permute.xlu0 %333
        %vm335 = vcmp.lt.s32.totalorder %v291, 15
        %v336 = vsel %vm335, %v332, %v334
        %v337 = vsel %vm335, %v334, %v332
        %s338 = scalar_lea.vmem %s1, 4
        %v339 = vld [vmem:[%s338] sm:$0x3]
        %v341 = vlaneseq
        %v342 = vshrl.u32 %v341, 7
        %v343 = vsub.s32 0, %v342
        %v344 = vrot.slane %v339, %v343
        %v345 = vlaneseq
        %v346 = vshrl.u32 %v345, 7
        %v347 = vsub.s32 1, %v346
        %v348 = vrot.slane %v339, %v347
        %v351 = vmul.f32 %v337, %v344
        %v352 = vmul.f32 %v336, %v348
        %353 = vrot.lane.b32.xlu0 %v282, 1
        %v354 = vpop.permute.xlu0 %353
        %355 = vrot.lane.b32.xlu0 %v284, 1
        %v356 = vpop.permute.xlu0 %355
        %vm357 = vcmp.lt.s32.totalorder %v291, 1
        %v358 = vsel %vm357, %v354, %v356
        %v359 = vsel %vm357, %v356, %v354
        %s360 = scalar_lea.vmem %s1, 6
        %v361 = vld [vmem:[%s360] sm:$0x3]
        %v363 = vlaneseq
        %v364 = vshrl.u32 %v363, 7
        %v365 = vsub.s32 0, %v364
        %v366 = vrot.slane %v361, %v365
        %v367 = vlaneseq
        %v368 = vshrl.u32 %v367, 7
        %v369 = vsub.s32 1, %v368
        %v370 = vrot.slane %v361, %v369
        %v373 = vmul.f32 %v359, %v366
        %v374 = vmul.f32 %v358, %v370
        %s375 = scalar_lea.vmem %s1, 8
        %v376 = vld [vmem:[%s375] sm:$0x3]
        %v378 = vlaneseq
        %v379 = vshrl.u32 %v378, 7
        %v380 = vsub.s32 0, %v379
        %v381 = vrot.slane %v376, %v380
        %v382 = vlaneseq
        %v383 = vshrl.u32 %v382, 7
        %v384 = vsub.s32 1, %v383
        %v385 = vrot.slane %v376, %v384
        %v386 = vcombine.low %v381, %v385
        %v388 = vmul.f32 %v282, %v386
        %389 = vrot.lane.b32.xlu0 %v282, 127
        %v390 = vpop.permute.xlu0 %389
        %391 = vrot.lane.b32.xlu0 %v284, 127
        %v392 = vpop.permute.xlu0 %391
        %vm393 = vcmp.lt.s32.totalorder %v291, 127
        %v394 = vsel %vm393, %v390, %v392
        %v395 = vsel %vm393, %v392, %v390
        %s396 = scalar_lea.vmem %s1, 10
        %v397 = vld [vmem:[%s396] sm:$0x3]
        %v399 = vlaneseq
        %v400 = vshrl.u32 %v399, 7
        %v401 = vsub.s32 0, %v400
        %v402 = vrot.slane %v397, %v401
        %v403 = vlaneseq
        %v404 = vshrl.u32 %v403, 7
        %v405 = vsub.s32 1, %v404
        %v406 = vrot.slane %v397, %v405
        %v409 = vmul.f32 %v394, %v402
        %v410 = vmul.f32 %v395, %v406
        %411 = vrot.lane.b32.xlu0 %v282, 113
        %v412 = vpop.permute.xlu0 %411
        %413 = vrot.lane.b32.xlu0 %v284, 113
        %v414 = vpop.permute.xlu0 %413
        %vm415 = vcmp.lt.s32.totalorder %v291, 113
        %v416 = vsel %vm415, %v412, %v414
        %v417 = vsel %vm415, %v414, %v412
        %s418 = scalar_lea.vmem %s1, 12
        %v419 = vld [vmem:[%s418] sm:$0x3]
        %v421 = vlaneseq
        %v422 = vshrl.u32 %v421, 7
        %v423 = vsub.s32 0, %v422
        %v424 = vrot.slane %v419, %v423
        %v425 = vlaneseq
        %v426 = vshrl.u32 %v425, 7
        %v427 = vsub.s32 1, %v426
        %v428 = vrot.slane %v419, %v427
        %v431 = vmul.f32 %v416, %v424
        %v432 = vmul.f32 %v417, %v428
        %433 = vrot.lane.b32.xlu0 %v282, 112
        %v434 = vpop.permute.xlu0 %433
        %435 = vrot.lane.b32.xlu0 %v284, 112
        %v436 = vpop.permute.xlu0 %435
        %vm437 = vcmp.lt.s32.totalorder %v291, 112
        %v438 = vsel %vm437, %v434, %v436
        %v439 = vsel %vm437, %v436, %v434
        %s440 = scalar_lea.vmem %s1, 14
        %v441 = vld [vmem:[%s440] sm:$0x3]
        %v443 = vlaneseq
        %v444 = vshrl.u32 %v443, 7
        %v445 = vsub.s32 0, %v444
        %v446 = vrot.slane %v441, %v445
        %v447 = vlaneseq
        %v448 = vshrl.u32 %v447, 7
        %v449 = vsub.s32 1, %v448
        %v450 = vrot.slane %v441, %v449
        %v453 = vmul.f32 %v438, %v446
        %v454 = vmul.f32 %v439, %v450
        %455 = vrot.lane.b32.xlu0 %v282, 111
        %v456 = vpop.permute.xlu0 %455
        %457 = vrot.lane.b32.xlu0 %v284, 111
        %v458 = vpop.permute.xlu0 %457
        %vm459 = vcmp.lt.s32.totalorder %v291, 111
        %v460 = vsel %vm459, %v456, %v458
        %v461 = vsel %vm459, %v458, %v456
        %s462 = scalar_lea.vmem %s1, 16
        %v463 = vld [vmem:[%s462] sm:$0x3]
        %v465 = vlaneseq
        %v466 = vshrl.u32 %v465, 7
        %v467 = vsub.s32 0, %v466
        %v468 = vrot.slane %v463, %v467
        %v469 = vlaneseq
        %v470 = vshrl.u32 %v469, 7
        %v471 = vsub.s32 1, %v470
        %v472 = vrot.slane %v463, %v471
        %v475 = vmul.f32 %v460, %v468
        %v476 = vmul.f32 %v461, %v472
        %v479 = vrot.slane %v329, 4
        %v480 = vrot.slane %v330, 4
        %v485 = vrot.slane %v373, 4
        %v486 = vrot.slane %v374, 4
        %v490 = vcombine.high %v388, %v388
        %v494 = vrot.slane %v409, 4
        %v495 = vrot.slane %v410, 4
        %v500 = vrot.slane %v453, 4
        %v501 = vrot.slane %v454, 4
        %vm504 = vcmask 1043456
        %v505 = vsel %vm504, %v307, %v479
        %v506 = vsel %vm504, %v308, %v480
        %v507 = vsel %vm504, %v351, %v485
        %v508 = vsel %vm504, %v352, %v486
        %v509 = vsel %vm504, %v388, %v494
        %v510 = vsel %vm504, %v490, %v495
        %v511 = vsel %vm504, %v431, %v500
        %v512 = vsel %vm504, %v432, %v501
        %v513 = vpack.c.bf16 %v507, %v505
        %v514 = vpack.c.bf16 %v508, %v506
        %v515 = vpack.c.bf16 %v511, %v509
        %v516 = vpack.c.bf16 %v512, %v510
        %v517 = vpack.c.bf16 %v475, %v475
        %v518 = vpack.c.bf16 %v476, %v476
        %v519 = vld [vmem:[#allocation5] sm:$0xf]
        %v520 = vld [vmem:[%s3] sm:$0xff]
        %522 = vset.pattern.permute.xlu0 0
        %523 = vperm.xlu0 %522, %v520
        %v524 = vpop.permute.xlu0 %523
        %vm526 = vcmask 293888
        %v528 = vsel %vm526, %v519, 0
        %vm530 = vcmask 1041408
        %v532 = vsel %vm530, %v517, 0
        %v535 = vsel %vm530, %v518, 0
        %537 = vmatprep.subr.bf16.mxu0 0
        %538 = vmatpush1.bf16.msra.mxu0 0
        %539 = vmatprep.subr.bf16.mxu0 0
        %540 = vmatpush1.bf16.msra.mxu0 0
        %541 = vmatprep.subr.bf16.mxu0 0
        %542 = vmatpush1.bf16.msra.mxu0 0
        %543 = vmatprep.subr.bf16.mxu0 0
        %544 = vmatpush1.bf16.msra.mxu0 0
        %545 = vmatprep.subr.bf16.mxu0 0
        %546 = vmatpush1.bf16.msra.mxu0 0
        %547 = vmatprep.subr.bf16.mxu0 %v535
        %548 = vmatpush1.bf16.msra.mxu0 %v532
        %549 = vmatprep.subr.bf16.mxu0 %v516
        %550 = vmatpush1.bf16.msra.mxu0 %v515
        %551 = vmatprep.subr.bf16.mxu0 %v514
        %552 = vmatpush1.bf16.msra.mxu0 %v513
        %553 = vmatprep.subr.bf16.mxu0 0
        %554 = vmatpush2.bf16.msra.mxu0 0
        %555 = vmatprep.subr.bf16.mxu0 0
        %556 = vmatpush2.bf16.msra.mxu0 0
        %557 = vmatprep.subr.bf16.mxu0 0
        %558 = vmatpush2.bf16.msra.mxu0 0
        %559 = vmatprep.subr.bf16.mxu0 0
        %560 = vmatpush2.bf16.msra.mxu0 0
        %561 = vmatprep.subr.bf16.mxu0 0
        %562 = vmatpush2.bf16.msra.mxu0 0
        %563 = vmatprep.subr.bf16.mxu0 0
        %564 = vmatpush2.bf16.msra.mxu0 0
        %565 = vmatprep.subr.bf16.mxu0 0
        %566 = vmatpush2.bf16.msra.mxu0 0
        %567 = vmatprep.subr.bf16.mxu0 0
        %568 = vmatpush2.bf16.msra.mxu0 0
        %569 = vmatprep.mubr.bf16.mxu0 0
        %570 = vmatmul.mubr.bf16.gmra.mxu0 %v528
        %v571 = vpop.f32.mrf.mxu0
        %v572 = vadd.f32 %v524, %v571
        %v573 = vpop.f32.mrf.mxu0
        %v574 = vadd.f32 %v524, %v573
        %v575 = vpop.f32.mrf.mxu0
        %v576 = vpop.f32.mrf.mxu0
        %577 = vdwg.mxu0
        %vm578 = vcmp.gt.f32.partialorder %v572, 0.0
        %vm579 = vcmp.gt.f32.partialorder %v574, 0.0
        %v580 = vmul.f32 %v572, 0.2
        %v581 = vmul.f32 %v574, 0.2
        %v582 = vsel %vm578, %v572, %v580
        %v583 = vsel %vm579, %v574, %v581
        %584 = vrot.lane.b32.xlu0 %v582, 17
        %v585 = vpop.permute.xlu0 %584
        %586 = vrot.lane.b32.xlu0 %v583, 17
        %v587 = vpop.permute.xlu0 %586
        %v588 = vsel %vm292, %v585, %v587
        %v589 = vsel %vm292, %v587, %v585
        %v590 = vmul.f32 %v589, %v300
        %v591 = vmul.f32 %v588, %v304
        %592 = vrot.lane.b32.xlu0 %v582, 16
        %v593 = vpop.permute.xlu0 %592
        %594 = vrot.lane.b32.xlu0 %v583, 16
        %v595 = vpop.permute.xlu0 %594
        %v596 = vsel %vm313, %v593, %v595
        %v597 = vsel %vm313, %v595, %v593
        %v598 = vmul.f32 %v597, %v322
        %v599 = vmul.f32 %v596, %v326
        %600 = vrot.lane.b32.xlu0 %v582, 15
        %v601 = vpop.permute.xlu0 %600
        %602 = vrot.lane.b32.xlu0 %v583, 15
        %v603 = vpop.permute.xlu0 %602
        %v604 = vsel %vm335, %v601, %v603
        %v605 = vsel %vm335, %v603, %v601
        %v606 = vmul.f32 %v605, %v344
        %v607 = vmul.f32 %v604, %v348
        %608 = vrot.lane.b32.xlu0 %v582, 1
        %v609 = vpop.permute.xlu0 %608
        %610 = vrot.lane.b32.xlu0 %v583, 1
        %v611 = vpop.permute.xlu0 %610
        %v612 = vsel %vm357, %v609, %v611
        %v613 = vsel %vm357, %v611, %v609
        %v614 = vmul.f32 %v613, %v366
        %v615 = vmul.f32 %v612, %v370
        %v618 = vmul.f32 %v582, %v381
        %v619 = vmul.f32 %v583, %v385
        %620 = vrot.lane.b32.xlu0 %v582, 127
        %v621 = vpop.permute.xlu0 %620
        %622 = vrot.lane.b32.xlu0 %v583, 127
        %v623 = vpop.permute.xlu0 %622
        %v624 = vsel %vm393, %v621, %v623
        %v625 = vsel %vm393, %v623, %v621
        %v626 = vmul.f32 %v624, %v402
        %v627 = vmul.f32 %v625, %v406
        %628 = vrot.lane.b32.xlu0 %v582, 113
        %v629 = vpop.permute.xlu0 %628
        %630 = vrot.lane.b32.xlu0 %v583, 113
        %v631 = vpop.permute.xlu0 %630
        %v632 = vsel %vm415, %v629, %v631
        %v633 = vsel %vm415, %v631, %v629
        %v634 = vmul.f32 %v632, %v424
        %v635 = vmul.f32 %v633, %v428
        %636 = vrot.lane.b32.xlu0 %v582, 112
        %v637 = vpop.permute.xlu0 %636
        %638 = vrot.lane.b32.xlu0 %v583, 112
        %v639 = vpop.permute.xlu0 %638
        %v640 = vsel %vm437, %v637, %v639
        %v641 = vsel %vm437, %v639, %v637
        %v642 = vmul.f32 %v640, %v446
        %v643 = vmul.f32 %v641, %v450
        %644 = vrot.lane.b32.xlu0 %v582, 111
        %v645 = vpop.permute.xlu0 %644
        %646 = vrot.lane.b32.xlu0 %v583, 111
        %v647 = vpop.permute.xlu0 %646
        %v648 = vsel %vm459, %v645, %v647
        %v649 = vsel %vm459, %v647, %v645
        %v650 = vmul.f32 %v648, %v468
        %v651 = vmul.f32 %v649, %v472
        %v652 = vpack.c.bf16 %v598, %v590
        %v653 = vpack.c.bf16 %v599, %v591
        %v654 = vpack.c.bf16 %v614, %v606
        %v655 = vpack.c.bf16 %v615, %v607
        %v656 = vpack.c.bf16 %v626, %v618
        %v657 = vpack.c.bf16 %v627, %v619
        %v658 = vpack.c.bf16 %v642, %v634
        %v659 = vpack.c.bf16 %v643, %v635
        %v660 = vpack.c.bf16 %v650, %v650
        %v661 = vpack.c.bf16 %v651, %v651
        %v662 = vld [vmem:[%s4] sm:$0xf]
        %v663 = vld [vmem:[%s5] sm:$0xff]
        %665 = vset.pattern.permute.xlu0 0
        %666 = vperm.xlu0 %665, %v663
        %v667 = vpop.permute.xlu0 %666
        %vm669 = vcmask 588800
        %v671 = vsel %vm669, %v662, 0
        %v674 = vsel %vm504, %v660, 0
        %v677 = vsel %vm504, %v661, 0
        %679 = vmatprep.subr.bf16.mxu0 0
        %680 = vmatpush1.bf16.msra.mxu0 0
        %681 = vmatprep.subr.bf16.mxu0 0
        %682 = vmatpush1.bf16.msra.mxu0 0
        %683 = vmatprep.subr.bf16.mxu0 0
        %684 = vmatpush1.bf16.msra.mxu0 0
        %685 = vmatprep.subr.bf16.mxu0 %v677
        %686 = vmatpush1.bf16.msra.mxu0 %v674
        %687 = vmatprep.subr.bf16.mxu0 %v659
        %688 = vmatpush1.bf16.msra.mxu0 %v658
        %689 = vmatprep.subr.bf16.mxu0 %v657
        %690 = vmatpush1.bf16.msra.mxu0 %v656
        %691 = vmatprep.subr.bf16.mxu0 %v655
        %692 = vmatpush1.bf16.msra.mxu0 %v654
        %693 = vmatprep.subr.bf16.mxu0 %v653
        %694 = vmatpush1.bf16.msra.mxu0 %v652
        %695 = vmatprep.subr.bf16.mxu0 0
        %696 = vmatpush2.bf16.msra.mxu0 0
        %697 = vmatprep.subr.bf16.mxu0 0
        %698 = vmatpush2.bf16.msra.mxu0 0
        %699 = vmatprep.subr.bf16.mxu0 0
        %700 = vmatpush2.bf16.msra.mxu0 0
        %701 = vmatprep.subr.bf16.mxu0 0
        %702 = vmatpush2.bf16.msra.mxu0 0
        %703 = vmatprep.subr.bf16.mxu0 0
        %704 = vmatpush2.bf16.msra.mxu0 0
        %705 = vmatprep.subr.bf16.mxu0 0
        %706 = vmatpush2.bf16.msra.mxu0 0
        %707 = vmatprep.subr.bf16.mxu0 0
        %708 = vmatpush2.bf16.msra.mxu0 0
        %709 = vmatprep.subr.bf16.mxu0 0
        %710 = vmatpush2.bf16.msra.mxu0 0
        %711 = vmatprep.mubr.bf16.mxu0 0
        %712 = vmatmul.mubr.bf16.gmra.mxu0 %v671
        %v713 = vpop.f32.mrf.mxu0
        %v714 = vadd.f32 %v667, %v713
        %v715 = vpop.f32.mrf.mxu0
        %v716 = vadd.f32 %v667, %v715
        %v717 = vpop.f32.mrf.mxu0
        %v718 = vpop.f32.mrf.mxu0
        %719 = vdwg.mxu0
        %720 = vrot.lane.b32.xlu0 %v714, 127
        %v721 = vpop.permute.xlu0 %720
        %722 = vrot.lane.b32.xlu0 %v716, 127
        %v723 = vpop.permute.xlu0 %722
        %v724 = vsel %vm393, %v721, %v723
        %v725 = vsel %vm393, %v723, %v721
        %v726 = vadd.f32 %v714, %v724
        %v727 = vadd.f32 %v716, %v725
        %728 = vrot.lane.b32.xlu0 %v726, 112
        %v729 = vpop.permute.xlu0 %728
        %730 = vrot.lane.b32.xlu0 %v727, 112
        %v731 = vpop.permute.xlu0 %730
        %v732 = vsel %vm437, %v729, %v731
        %v733 = vsel %vm437, %v731, %v729
        %v734 = vadd.f32 %v726, %v732
        %v735 = vadd.f32 %v727, %v733
        %v736 = vmul.f32 %v734, 0.25
        %v737 = vmul.f32 %v735, 0.25
        %vm738 = vcmp.gt.f32.partialorder %v736, 0.0
        %vm739 = vcmp.gt.f32.partialorder %v737, 0.0
        %v740 = vmul.f32 %v736, 0.2
        %v741 = vmul.f32 %v737, 0.2
        %v742 = vsel %vm738, %v736, %v740
        %v743 = vsel %vm739, %v737, %v741
        %744 = vst [vmem:[%s280] sm:$0xff] %v742
        %745 = vst [vmem:[%s280 + $0x8] sm:$0xff] %v743
        %s746 = sand.u32 %s163, 1
        %s747 = scalar_lea.sflag [#allocation4], %s746
        %s748 = sand.u32 %s163, 1
        %s749 = smul.addr %s748, 16
        %s750 = scalar_lea.vmem [#allocation7], %s749
        // Predicated region
        $region53: #{tpu_custom_call.1} parent=43 // pred_check
          %p751 = pneg %p173
        $region54: #{tpu_custom_call.1} parent=43 // pred_check_branch
          %753 = sbr.rel (%p751) target = $region56
        $region55: #{tpu_custom_call.1} parent=43 // pred_region
          %s755 = ssub.s32 256, 256
          %756 = vsyncadd %s747, %s755
          %s757 = smul.addr %s24, 2
          %s758 = smul.addr %s757, 128
          %s759 = scalar_lea.hbm %s6, %s758
          %s761 = sshll.u32 %s750, 4
          %s762 = int_to_ptr.vmem [resolvable:$true] %s761
          %764 = dma.vmem_to_hbm [thread:$0]  %s762, 256, %s759, %s747
        $region56: #{tpu_custom_call.1} parent=43 // pred_fallthru
          _
      $region44: #{tpu_custom_call.1} parent=5 // pred_fallthru
        _
      %p765 = scmp.le.s32.totalorder 2, %s19
      // Predicated region
      $region57: #{tpu_custom_call.1} parent=5 // pred_check
        %p766 = pneg %p765
      $region58: #{tpu_custom_call.1} parent=5 // pred_check_branch
        %768 = sbr.rel (%p766) target = $region60
      $region59: #{tpu_custom_call.1} parent=5 // pred_region
        %s769 = ssub.s32 %s19, 2
        // Predicated region
        $region61: #{tpu_custom_call.1} parent=59 // pred_check
          %p770 = pneg %p179
        $region62: #{tpu_custom_call.1} parent=59 // pred_check_branch
          %772 = sbr.rel (%p770) target = $region64
        $region63: #{tpu_custom_call.1} parent=59 // pred_region
          %s773 = sand.u32 %s164, 1
          %s774 = scalar_lea.sflag [#allocation4], %s773
          %s775 = sand.u32 %s164, 1
          %s776 = smul.addr %s775, 16
          %s777 = scalar_lea.vmem [#allocation7], %s776
          %778 = dma.done %s774, 256
        $region64: #{tpu_custom_call.1} parent=59 // pred_fallthru
          _
      $region60: #{tpu_custom_call.1} parent=5 // pred_fallthru
        _
    $region6: #{tpu_custom_call.1} parent=1 // loop_footer
      %s23 = sadd.s32 1, %s19
    $region7: #{tpu_custom_call.1} parent=1 // loop_footer_branch
      %18 = sbr.rel target = $region3
    $region8: #{tpu_custom_call.1} parent=1 // loop_exit
      _
    %779 = vsyncpa [#allocation3], 1
    %s780 = scalar_lea.sflag [#allocation3], 1
    %781 = vsyncpa %s780, 1
    %782 = vsyncpa [#allocation6], 1
    %783 = vsyncpa [#allocation4], 1
    %s784 = scalar_lea.sflag [#allocation4], 1
    %785 = vsyncpa %s784, 1

</llo_original>
